<compile_context>
chip_gen: v5e
topology: v5e:2x2
jax: 0.10.0
libtpu: 0.0.40
codegen_flags: <defaults>
</compile_context>

<pallas_src>
import functools

import jax
import jax.numpy as jnp
from jax.experimental import pallas as pl
from jax.experimental.pallas import tpu as pltpu


def _solidmark_kernel(key_ref, img_ref, out_ref, *, thickness: int):
    """One (cb, H, W) -> (cb, Hp, Wp) channel block per grid step.

    key_ref: SMEM (1,) f32 scalar.
    img_ref: VMEM (cb, H, W) block.
    out_ref: VMEM (cb, Hp, Wp) block; Hp=H+2t, Wp=W+2t.
    """
    t = thickness
    cb, h, w = img_ref.shape
    dt = out_ref.dtype
    img = img_ref[...].astype(dt)

    if t == 0:  # static Python branch; degenerate no-padding case
        out_ref[...] = img
        return

    k = key_ref[0].astype(dt)
    wp = w + 2 * t

    # Assemble the full padded block in registers (VPU/XLU work, off the
    # store slot), then store it once, full-tile and unmasked.
    side = jnp.full((cb, h, t), k, dtype=dt)
    mid = jnp.concatenate([side, img, side], axis=-1)        # (cb, h, wp)
    stripe = jnp.full((cb, t, wp), k, dtype=dt)               # (cb, t, wp)
    out_ref[...] = jnp.concatenate([stripe, mid, stripe], axis=1)


def _choose_channel_block(c: int, bytes_per_channel: int,
                          target_bytes: int = 4 << 20) -> int:
    """Largest divisor of c whose block fits `target_bytes`, preferring >=2 steps."""
    divisors = [d for d in range(1, c + 1) if c % d == 0]
    fitting = [d for d in divisors if d * bytes_per_channel <= target_bytes]
    if not fitting:
        return 1
    multi_step = [d for d in fitting if c // d >= 2]
    return max(multi_step) if multi_step else max(fitting)


def solid_mark(img: jax.Array, key, thickness: int = 4,
               out_dtype=jnp.float32) -> jax.Array:
    """Pallas implementation of SolidMark.forward(img, key).

    `out_dtype` defaults to float32 to match torch.zeros(...) + key semantics;
    pass img.dtype to keep e.g. bf16 end-to-end if the consumer allows it.
    """
    c, h, w = img.shape
    t = int(thickness)
    hp, wp = h + 2 * t, w + 2 * t

    key_arr = jnp.asarray(key, dtype=jnp.float32).reshape((1,))
    kernel = functools.partial(_solidmark_kernel, thickness=t)

    itemsize_in = jnp.dtype(img.dtype).itemsize
    itemsize_out = jnp.dtype(out_dtype).itemsize
    in_ch_bytes = h * w * itemsize_in
    out_ch_bytes = hp * wp * itemsize_out

    # Pick a channel block size (~<=4 MiB per block, >=2 grid steps when possible).
    cb = _choose_channel_block(c, in_ch_bytes + out_ch_bytes)
    grid_c = c // cb

    # VMEM budget: double-buffered in + out blocks, plus modest headroom.
    # Capped at 48 MiB so we never ask for all of v7x's 64 MiB physical VMEM.
    vmem_need = 2 * cb * (in_ch_bytes + out_ch_bytes)
    vmem_cap = 48 << 20
    if vmem_need > vmem_cap:
        # TODO(synk): add row tiling (second grid axis over Hp) for this case.
        raise ValueError(
            f"SolidMark channel block ({vmem_need} bytes double-buffered) "
            f"exceeds the {vmem_cap}-byte VMEM budget; image too large for "
            "per-channel blocking.")
    vmem_limit = int(min(vmem_need + (4 << 20), vmem_cap))

    return pl.pallas_call(
        kernel,
        out_shape=jax.ShapeDtypeStruct((c, hp, wp), out_dtype),
        grid=(grid_c,),
        in_specs=[
            # key: tiny scalar, lives in SMEM, same for every grid step.
            pl.BlockSpec(memory_space=pltpu.MemorySpace.SMEM),
            # img: cb channels per grid step.
            pl.BlockSpec((cb, h, w), lambda i: (i, 0, 0)),
        ],
        out_specs=pl.BlockSpec((cb, hp, wp), lambda i: (i, 0, 0)),
        compiler_params=pltpu.CompilerParams(
            dimension_semantics=("parallel",),   # v7x: shard channel blocks over 2 TCs
            vmem_limit_bytes=vmem_limit,
        ),
    )(key_arr, img)


if __name__ == "__main__":
    rng = jax.random.PRNGKey(0)
    # Small (C, H, W) shape consistent with the module's 3-D input convention.
    C, H, W = 4, 16, 16
    thickness = 4
    key_val = 0.625

    img = jax.random.uniform(rng, (C, H, W), dtype=jnp.float32)

    out = solid_mark(img, key_val, thickness=thickness)
    out = jax.block_until_ready(out)

    # Reference check (plain JAX).
    ref = jnp.pad(
        img.astype(jnp.float32),
        ((0, 0), (thickness, thickness), (thickness, thickness)),
        mode="constant",
        constant_values=key_val,
    )
    assert out.shape == (C, H + 2 * thickness, W + 2 * thickness)
    assert out.dtype == jnp.float32
    assert jnp.allclose(out, ref, atol=1e-6), "mismatch vs reference"

    print("KERNEL_OK")
</pallas_src>

<mosaic_0001>
module attributes {stable_mosaic.version = 11 : i64} {
  func.func @_solidmark_kernel(%arg0: i32, %arg1: memref<1xf32, #tpu.memory_space<smem>>, %arg2: memref<2x16x16xf32, #tpu.memory_space<vmem>>, %arg3: memref<2x24x24xf32, #tpu.memory_space<vmem>>) attributes {dimension_semantics = [#tpu.dimension_semantics<parallel>], iteration_bounds = array<i64: 2>, scalar_prefetch = 0 : i64, scratch_operands = 0 : i64, tpu.core_type = #tpu.core_type<tc>, window_params = [{transform_indices = @transform_0, window_bounds = array<i64: 1>}, {transform_indices = @transform_1, window_bounds = array<i64: 2, 16, 16>}, {transform_indices = @transform_2, window_bounds = array<i64: 2, 24, 24>}]} {
    %c0 = arith.constant 0 : index
    %c0_0 = arith.constant 0 : index
    %c0_1 = arith.constant 0 : index
    %0 = vector.load %arg2[%c0, %c0_0, %c0_1] : memref<2x16x16xf32, #tpu.memory_space<vmem>>, vector<2x16x16xf32>
    %c0_2 = arith.constant 0 : index
    %1 = memref.load %arg1[%c0_2] : memref<1xf32, #tpu.memory_space<smem>>
    %2 = vector.broadcast %1 : f32 to vector<2x16x4xf32>
    %3 = tpu.concatenate %2, %0, %2 in 2 : vector<2x16x4xf32>, vector<2x16x16xf32>, vector<2x16x4xf32> -> vector<2x16x24xf32>
    %4 = vector.broadcast %1 : f32 to vector<2x4x24xf32>
    %5 = tpu.concatenate %4, %3, %4 in 1 : vector<2x4x24xf32>, vector<2x16x24xf32>, vector<2x4x24xf32> -> vector<2x24x24xf32>
    %c0_3 = arith.constant 0 : index
    %c0_4 = arith.constant 0 : index
    %c0_5 = arith.constant 0 : index
    %6 = vector.load %arg3[%c0_3, %c0_4, %c0_5] : memref<2x24x24xf32, #tpu.memory_space<vmem>>, vector<2x24x24xf32>
    tpu.vector_store %arg3[%c0_3, %c0_4, %c0_5], %5 {strides = array<i32>} : memref<2x24x24xf32, #tpu.memory_space<vmem>>, vector<2x24x24xf32>,
    return
  }
  func.func @transform_0(%arg0: i32) -> i32 {
    %c0_i32 = arith.constant 0 : i32
    %c0_i32_0 = arith.constant 0 : i32
    return %c0_i32 : i32
  }
  func.func @transform_1(%arg0: i32) -> (i32, i32, i32) {
    %c0_i32 = arith.constant 0 : i32
    %c0_i32_0 = arith.constant 0 : i32
    %c0_i32_1 = arith.constant 0 : i32
    return %arg0, %c0_i32, %c0_i32_0 : i32, i32, i32
  }
  func.func @transform_2(%arg0: i32) -> (i32, i32, i32) {
    %c0_i32 = arith.constant 0 : i32
    %c0_i32_0 = arith.constant 0 : i32
    %c0_i32_1 = arith.constant 0 : i32
    return %arg0, %c0_i32, %c0_i32_0 : i32, i32, i32
  }
}

</mosaic_0001>

<llo_original>
// kernel: tpu_custom_call.1
$region0: #{tpu_custom_call.1}
  #allocation0 [shape = 'u32[]', space=smem, size = 0x4, offset = 0x4, fixed_abs, tag = 'smem constant byte address 0x4 - core index']
  #allocation1 [shape = 'u32[72,128]{1,0:T(1,128)}', space=vmem, size = 0x9000, scoped, tag = 'internal scratch']
  #allocation2 [shape = 'f32[1]{0:T(128)S(6)}', space=smem, size = 0x200, scoped, tag = 'scoped memory for tpu_custom_call.1']
  %s0 = inlined_call_operand.<no memory space> [shape: f32[1], index: 0, kind: input, shape index: {}]
  %s1 = inlined_call_operand.hbm [shape: f32[4,16,16], index: 1, kind: input, shape index: {}]
  %s2 = inlined_call_operand.hbm [shape: f32[4,24,24], index: 2, kind: output, shape index: {}]
  %s3 = sld [smem:[#allocation0]]
  $region45: #{tpu_custom_call.1} parent=0
    _
  %s5 = ssub.s32 1, %s3
  %s6 = scalar_select 0, %s5, %s3
  %7 = sst [smem:[#allocation2]] %s0
  $region1: #{tpu_custom_call.1} parent=0
    #allocation3 [shape = 'u8[32768]{0}', space=vmem, size = 0x8000, scoped, tag = 'input window, operand 1']
    #allocation4 [shape = 's32[2]{0}', space=sflag, size = 0x8, scoped, tag = 'scoped memory for tpu_custom_call.1']
    #allocation5 [shape = 's32[2]{0}', space=sflag, size = 0x8, scoped, tag = 'scoped memory for tpu_custom_call.1']
    #allocation6 [shape = 'u8[49152]{0}', space=vmem, size = 0xc000, scoped, tag = 'output window, operand 0']
    %8 = vsyncpa [#allocation4], 0
    %s9 = scalar_lea.sflag [#allocation4], 1
    %10 = vsyncpa %s9, 0
    %11 = vsyncpa [#allocation5], 0
    %s12 = scalar_lea.sflag [#allocation5], 1
    %13 = vsyncpa %s12, 0
    loop: start=0, step=1, limit=4
    $region2: #{tpu_custom_call.1} parent=1 // loop_pre_header
      _
    $region3: #{tpu_custom_call.1} parent=1 // loop_header
      %s15 = sphi 0, %s19
      %p16 = scmp.ge.s32.totalorder %s15, 4
      %s23 = sphi 0, %s23
      %s25 = sphi 0, %s23
      %s26 = sphi 0, %s25
      %s40 = sphi 0, %s26
      %s46 = sphi 0, %s48
      %s49 = sphi 0, %s46
      %s50 = sphi 0, %s49
      %s66 = sphi 0, %s50
      %s72 = sphi 0, %s74
      %s75 = sphi 0, %s72
      %s76 = sphi 0, %s75
      %s92 = sphi 0, %s76
    $region4: #{tpu_custom_call.1} parent=1 // loop_header_branch
      %18 = sbr.rel (%p16) target = $region8
    $region5: #{tpu_custom_call.1} parent=1 // loop_body
      %s20 = ssub.s32 %s15, 1
      %s21 = ssub.s32 %s15, 2
      %s22 = sadd.s32 %s15, 1
      %s24 = sadd.s32 %s23, 1
      %p27 = scmp.eq.s32.totalorder %s15, 1
      %p28 = scmp.ne.s32.totalorder %s23, %s25
      %p29 = scmp.eq.s32.totalorder %s15, 0
      %p30 = por %p28, %p29
      %p31 = scmp.ne.s32.totalorder %s23, %s25
      %p32 = scmp.eq.s32.totalorder %s20, 1
      %p33 = por %p31, %p32
      %p34 = scmp.ne.s32.totalorder %s25, %s26
      %p35 = scmp.eq.s32.totalorder %s20, 0
      %p36 = por %p34, %p35
      %p37 = scmp.ne.s32.totalorder %s25, %s26
      %p38 = scmp.eq.s32.totalorder %s21, 1
      %p39 = por %p37, %p38
      %p41 = scmp.ne.s32.totalorder %s26, %s40
      %p42 = scmp.eq.s32.totalorder %s21, 0
      %p43 = por %p41, %p42
      %s44 = ssub.s32 %s15, %s22
      %p45 = scmp.eq.s32.totalorder %s44, 0
      %s47 = sadd.s32 %s46, 1
      %s48 = scalar_select %p45, %s46, %s47
      %p51 = pneg %p45
      %p52 = scmp.eq.s32.totalorder %s15, 1
      %p53 = por %p51, %p52
      %p54 = scmp.ne.s32.totalorder %s46, %s49
      %p55 = scmp.eq.s32.totalorder %s15, 0
      %p56 = por %p54, %p55
      %p57 = scmp.ne.s32.totalorder %s46, %s49
      %p58 = scmp.eq.s32.totalorder %s20, 1
      %p59 = por %p57, %p58
      %p60 = scmp.ne.s32.totalorder %s49, %s50
      %p61 = scmp.eq.s32.totalorder %s20, 0
      %p62 = por %p60, %p61
      %p63 = scmp.ne.s32.totalorder %s49, %s50
      %p64 = scmp.eq.s32.totalorder %s21, 1
      %p65 = por %p63, %p64
      %p67 = scmp.ne.s32.totalorder %s50, %s66
      %p68 = scmp.eq.s32.totalorder %s21, 0
      %p69 = por %p67, %p68
      %s70 = ssub.s32 %s15, %s22
      %p71 = scmp.eq.s32.totalorder %s70, 0
      %s73 = sadd.s32 %s72, 1
      %s74 = scalar_select %p71, %s72, %s73
      %p77 = pneg %p71
      %p78 = scmp.eq.s32.totalorder %s15, 1
      %p79 = por %p77, %p78
      %p80 = scmp.ne.s32.totalorder %s72, %s75
      %p81 = scmp.eq.s32.totalorder %s15, 0
      %p82 = por %p80, %p81
      %p83 = scmp.ne.s32.totalorder %s72, %s75
      %p84 = scmp.eq.s32.totalorder %s20, 1
      %p85 = por %p83, %p84
      %p86 = scmp.ne.s32.totalorder %s75, %s76
      %p87 = scmp.eq.s32.totalorder %s20, 0
      %p88 = por %p86, %p87
      %p89 = scmp.ne.s32.totalorder %s75, %s76
      %p90 = scmp.eq.s32.totalorder %s21, 1
      %p91 = por %p89, %p90
      %p93 = scmp.ne.s32.totalorder %s76, %s92
      %p94 = scmp.eq.s32.totalorder %s21, 0
      %p95 = por %p93, %p94
      %p96 = scmp.le.s32.totalorder 1, %s15
      %p97 = scmp.lt.s32.totalorder %s15, 3
      %p98 = pnand %p96, %p97
      %p99 = pneg %p98
      // Predicated region
      $region9: #{tpu_custom_call.1} parent=5 // pred_check
        _
      $region10: #{tpu_custom_call.1} parent=5 // pred_check_branch
        %101 = sbr.rel (%p98) target = $region12
      $region11: #{tpu_custom_call.1} parent=5 // pred_region
        %s102 = ssub.s32 %s15, 1
        // Predicated region
        $region13: #{tpu_custom_call.1} parent=11 // pred_check
          %p103 = pneg %p36
        $region14: #{tpu_custom_call.1} parent=11 // pred_check_branch
          %105 = sbr.rel (%p103) target = $region16
        $region15: #{tpu_custom_call.1} parent=11 // pred_region
          _
        $region16: #{tpu_custom_call.1} parent=11 // pred_fallthru
          _
      $region12: #{tpu_custom_call.1} parent=5 // pred_fallthru
        _
      %p106 = scmp.lt.s32.totalorder %s15, 2
      // Predicated region
      $region17: #{tpu_custom_call.1} parent=5 // pred_check
        %p107 = pneg %p106
      $region18: #{tpu_custom_call.1} parent=5 // pred_check_branch
        %109 = sbr.rel (%p107) target = $region20
      $region19: #{tpu_custom_call.1} parent=5 // pred_region
        // Predicated region
        $region21: #{tpu_custom_call.1} parent=19 // pred_check
          %p110 = pneg %p56
        $region22: #{tpu_custom_call.1} parent=19 // pred_check_branch
          %112 = sbr.rel (%p110) target = $region24
        $region23: #{tpu_custom_call.1} parent=19 // pred_region
          %s113 = sand.u32 %s46, 1
          %s114 = scalar_lea.sflag [#allocation4], %s113
          %s115 = sand.u32 %s46, 1
          %s116 = smul.addr %s115, 32
          %s117 = scalar_lea.vmem [#allocation3], %s116
          %s118 = smul.u32 2, %s15
          %120 = vsyncadd %s114, 0
          %s121 = smul.addr %s118, 2
          %s122 = smul.addr %s121, 8
          %s123 = scalar_lea.hbm %s1, %s122
          %s124 = sshll.u32 %s123, 4
          %s125 = int_to_ptr.hbm [resolvable:$true] %s124
          %s126 = sshll.u32 %s117, 4
          %s127 = int_to_ptr.vmem [resolvable:$true] %s126
          %132 = dma.hbm_to_vmem [thread:$0]  %s125, 512, %s127, %s114, 128, 128, 8
        $region24: #{tpu_custom_call.1} parent=19 // pred_fallthru
          _
      $region20: #{tpu_custom_call.1} parent=5 // pred_fallthru
        _
      %p133 = scmp.le.s32.totalorder 1, %s15
      %p134 = scmp.lt.s32.totalorder %s15, 3
      %p135 = pnand %p133, %p134
      %p136 = pneg %p135
      // Predicated region
      $region25: #{tpu_custom_call.1} parent=5 // pred_check
        _
      $region26: #{tpu_custom_call.1} parent=5 // pred_check_branch
        %138 = sbr.rel (%p135) target = $region28
      $region27: #{tpu_custom_call.1} parent=5 // pred_region
        %s139 = ssub.s32 %s15, 1
        %s140 = sand.u32 %s49, 1
        %s141 = scalar_lea.sflag [#allocation4], %s140
        %s142 = sand.u32 %s49, 1
        %s143 = smul.addr %s142, 32
        %s144 = scalar_lea.vmem [#allocation3], %s143
        // Predicated region
        $region29: #{tpu_custom_call.1} parent=27 // pred_check
          %p145 = pneg %p62
        $region30: #{tpu_custom_call.1} parent=27 // pred_check_branch
          %147 = sbr.rel (%p145) target = $region32
        $region31: #{tpu_custom_call.1} parent=27 // pred_region
          %149 = dma.done %s141, 512
        $region32: #{tpu_custom_call.1} parent=27 // pred_fallthru
          _
        %p150 = pneg %p36
        %p151 = pneg %p33
        %s152 = sand.u32 %s49, 1
        %s153 = scalar_lea.sflag [#allocation4], %s152
        %s154 = sand.u32 %s49, 1
        %s155 = smul.addr %s154, 32
        %s156 = scalar_lea.vmem [#allocation3], %s155
        %p157 = pneg %p62
        %p158 = pneg %p59
        %p159 = pneg %p88
        %p160 = pneg %p85
        %s161 = sand.u32 %s75, 1
        %s162 = scalar_lea.sflag [#allocation5], %s161
        %s163 = sand.u32 %s75, 1
        %s164 = smul.addr %s163, 48
        %s165 = scalar_lea.vmem [#allocation6], %s164
        %s166 = smul.u32 2, %s20
        %s167 = smul.u32 2, %s20
        %v168 = vld [vmem:[%s144] sm:$0xff]
        %v169 = vld [vmem:[%s144 + $0x8] sm:$0xff]
        %v170 = vld [vmem:[%s144 + $0x10] sm:$0xff]
        %v171 = vld [vmem:[%s144 + $0x18] sm:$0xff]
        %s172 = sld [smem:[#allocation2]]
        %v173 = vstv %s172
        %178 = vrot.lane.b32.xlu0 %v168, 4
        %v179 = vpop.permute.xlu0 %178
        %180 = vrot.lane.b32.xlu0 %v169, 4
        %v181 = vpop.permute.xlu0 %180
        %182 = vrot.lane.b32.xlu0 %v170, 4
        %v183 = vpop.permute.xlu0 %182
        %184 = vrot.lane.b32.xlu0 %v171, 4
        %v185 = vpop.permute.xlu0 %184
        %vm190 = vcmask 31744
        %v191 = vsel %vm190, %v173, %v179
        %v192 = vsel %vm190, %v173, %v181
        %v193 = vsel %vm190, %v173, %v183
        %v194 = vsel %vm190, %v173, %v185
        %vm195 = vcmask 162816
        %v196 = vsel %vm195, %v191, %v173
        %v197 = vsel %vm195, %v192, %v173
        %v198 = vsel %vm195, %v193, %v173
        %v199 = vsel %vm195, %v194, %v173
        %vm204 = vcmask 1043456
        %v205 = vrot.slane %v196, 4
        %v206 = vrot.slane %v197, 4
        %v207 = vsel %vm204, %v205, %v206
        %v208 = vrot.slane %v198, 4
        %v209 = vrot.slane %v199, 4
        %v210 = vsel %vm204, %v208, %v209
        %v217 = vsel %vm204, %v173, %v205
        %v218 = vsel %vm204, %v173, %v208
        %v219 = vsel %vm204, %v206, %v173
        %v220 = vsel %vm204, %v209, %v173
        %vm221 = vcmask 195584
        %222 = vst.msk [vmem:[%s165] sm:$0xff] %vm221, %v217
        %223 = vst.msk [vmem:[%s165 + $0x8] sm:$0xff] %vm221, %v207
        %224 = vst.msk [vmem:[%s165 + $0x10] sm:$0xff] %vm221, %v219
        %225 = vst.msk [vmem:[%s165 + $0x18] sm:$0xff] %vm221, %v218
        %226 = vst.msk [vmem:[%s165 + $0x20] sm:$0xff] %vm221, %v210
        %227 = vst.msk [vmem:[%s165 + $0x28] sm:$0xff] %vm221, %v220
        %s228 = sand.u32 %s75, 1
        %s229 = scalar_lea.sflag [#allocation5], %s228
        %s230 = sand.u32 %s75, 1
        %s231 = smul.addr %s230, 48
        %s232 = scalar_lea.vmem [#allocation6], %s231
        // Predicated region
        $region33: #{tpu_custom_call.1} parent=27 // pred_check
          %p233 = pneg %p85
        $region34: #{tpu_custom_call.1} parent=27 // pred_check_branch
          %235 = sbr.rel (%p233) target = $region36
        $region35: #{tpu_custom_call.1} parent=27 // pred_region
          %s236 = smul.u32 2, %s20
          %238 = vsyncadd %s229, 0
          %s239 = smul.addr %s236, 3
          %s240 = smul.addr %s239, 8
          %s241 = scalar_lea.hbm %s2, %s240
          %s242 = sshll.u32 %s232, 4
          %s243 = int_to_ptr.vmem [resolvable:$true] %s242
          %s244 = sshll.u32 %s241, 4
          %s245 = int_to_ptr.hbm [resolvable:$true] %s244
          %250 = dma.vmem_to_hbm [thread:$0]  %s243, 768, %s245, %s229, 128, 128, 8
        $region36: #{tpu_custom_call.1} parent=27 // pred_fallthru
          _
      $region28: #{tpu_custom_call.1} parent=5 // pred_fallthru
        _
      %p251 = scmp.le.s32.totalorder 2, %s15
      // Predicated region
      $region37: #{tpu_custom_call.1} parent=5 // pred_check
        %p252 = pneg %p251
      $region38: #{tpu_custom_call.1} parent=5 // pred_check_branch
        %254 = sbr.rel (%p252) target = $region40
      $region39: #{tpu_custom_call.1} parent=5 // pred_region
        %s255 = ssub.s32 %s15, 2
        // Predicated region
        $region41: #{tpu_custom_call.1} parent=39 // pred_check
          %p256 = pneg %p91
        $region42: #{tpu_custom_call.1} parent=39 // pred_check_branch
          %258 = sbr.rel (%p256) target = $region44
        $region43: #{tpu_custom_call.1} parent=39 // pred_region
          %s259 = sand.u32 %s76, 1
          %s260 = scalar_lea.sflag [#allocation5], %s259
          %s261 = sand.u32 %s76, 1
          %s262 = smul.addr %s261, 48
          %s263 = scalar_lea.vmem [#allocation6], %s262
          %265 = dma.done %s260, 768
        $region44: #{tpu_custom_call.1} parent=39 // pred_fallthru
          _
      $region40: #{tpu_custom_call.1} parent=5 // pred_fallthru
        _
    $region6: #{tpu_custom_call.1} parent=1 // loop_footer
      %s19 = sadd.s32 1, %s15
    $region7: #{tpu_custom_call.1} parent=1 // loop_footer_branch
      %14 = sbr.rel target = $region3
    $region8: #{tpu_custom_call.1} parent=1 // loop_exit
      _
    %266 = vsyncpa [#allocation4], 1
    %s267 = scalar_lea.sflag [#allocation4], 1
    %268 = vsyncpa %s267, 1
    %269 = vsyncpa [#allocation5], 1
    %s270 = scalar_lea.sflag [#allocation5], 1
    %271 = vsyncpa %s270, 1

</llo_original>
